<compile_context>
chip_gen: v7x
topology: tpu7x:2x2x1
jax: 0.10.0
libtpu: 0.0.40
codegen_flags: <defaults>
</compile_context>

<pallas_src>
import jax
import jax.numpy as jnp
from jax.experimental import pallas as pl
from jax.experimental.pallas import tpu as pltpu


SUBLANE = 8      # sublane granule: second-to-last-dim alignment target
TB_MAX = 2048    # max batch-tile rows per grid step


def _round_up(n, m):
    return (n + m - 1) // m * m


def mlp_kernel(x_ref, w1_ref, b1_ref, w2_ref, b2_ref, o_ref):
    # MXU operands in bf16 (no-op if already bf16), f32 accumulation on MXU.
    x = x_ref[...].astype(jnp.bfloat16)
    w1 = w1_ref[...].astype(jnp.bfloat16)
    w2 = w2_ref[...].astype(jnp.bfloat16)
    # layer1: Linear(num_input -> num_hidden)
    h = jnp.dot(x, w1, preferred_element_type=jnp.float32)
    # layer2: bias add (VPU) + Tanh (EUP), kept in f32 (no bf16 VPU/EUP on v5e)
    h = jnp.tanh(h + b1_ref[...])
    # layer3: Linear(num_hidden -> num_output)
    out = jnp.dot(h.astype(jnp.bfloat16), w2, preferred_element_type=jnp.float32)
    o_ref[...] = (out + b2_ref[...]).astype(o_ref.dtype)


def module_net_forward(x, w1, b1, w2, b2):
    """x: (B, num_input) f32. Returns (B, num_output) f32.

    Computes tanh(x @ w1 + b1) @ w2 + b2, i.e. the PyTorch module's forward.
    """
    B, num_input = x.shape
    num_hidden = w1.shape[1]
    num_output = w2.shape[1]

    # ---- batch tiling: adaptive, minimal padding, >=2 steps when possible ---
    n_steps = -(-B // TB_MAX)
    if n_steps < 2 and B > SUBLANE:
        n_steps = 2          # v7x: >=2 grid steps so both TensorCores get work
    TB = _round_up(-(-B // n_steps), SUBLANE)
    Bp = n_steps * TB

    if Bp != B:
        # Pad only the batch dim (< TB extra rows). Padded rows produce finite
        # values (tanh(b1) @ w2 + b2) and are sliced off below.
        xp = jnp.pad(x, ((0, Bp - B), (0, 0)))
    else:
        xp = x

    # Biases as (1, F) rows so blocks are 2-D.
    b1r = b1.reshape(1, num_hidden)
    b2r = b2.reshape(1, num_output)

    cost = pl.CostEstimate(
        flops=2 * Bp * (num_input * num_hidden + num_hidden * num_output),
        transcendentals=Bp * num_hidden,
        bytes_accessed=(Bp * num_input * 4
                        + num_input * num_hidden * 4
                        + num_hidden * num_output * 4
                        + Bp * num_output * 4),
    )

    out = pl.pallas_call(
        mlp_kernel,
        out_shape=jax.ShapeDtypeStruct((Bp, num_output), jnp.float32),
        grid=(n_steps,),
        in_specs=[
            pl.BlockSpec((TB, num_input), lambda i: (i, 0)),            # x: batch-tiled, pipelined
            pl.BlockSpec((num_input, num_hidden), lambda i: (0, 0)),    # W1: resident in VMEM
            pl.BlockSpec((1, num_hidden), lambda i: (0, 0)),            # b1: resident
            pl.BlockSpec((num_hidden, num_output), lambda i: (0, 0)),   # W2: resident
            pl.BlockSpec((1, num_output), lambda i: (0, 0)),            # b2: resident
        ],
        out_specs=pl.BlockSpec((TB, num_output), lambda i: (i, 0)),
        compiler_params=pltpu.CompilerParams(
            dimension_semantics=("parallel",),  # shard batch grid across v7x's 2 TCs
        ),
        cost_estimate=cost,
    )(xp, w1, b1r, w2, b2r)

    if Bp != B:
        out = out[:B]
    return out


def init_linear_params(key, fan_in, fan_out):
    """Deterministic PyTorch-style nn.Linear init: U(-1/sqrt(fan_in), 1/sqrt(fan_in))."""
    kw, kb = jax.random.split(key)
    bound = 1.0 / jnp.sqrt(jnp.float32(fan_in))
    # stored as (fan_in, fan_out) so the kernel can do x @ W directly
    w = jax.random.uniform(kw, (fan_in, fan_out), jnp.float32, -bound, bound)
    b = jax.random.uniform(kb, (fan_out,), jnp.float32, -bound, bound)
    return w, b


if __name__ == "__main__":
    key = jax.random.PRNGKey(0)
    k_x, k_x2, k_l1, k_l3 = jax.random.split(key, 4)

    num_input, num_hidden, num_output = 32, 64, 16
    w1, b1 = init_linear_params(k_l1, num_input, num_hidden)
    w2, b2 = init_linear_params(k_l3, num_hidden, num_output)

    bf16 = jnp.bfloat16

    def ref_f32(x):
        return jnp.tanh(x @ w1 + b1) @ w2 + b2

    def ref_bf16(x):
        # Same bf16-operand / f32-accumulate numerics as the kernel.
        h = jnp.dot(x.astype(bf16), w1.astype(bf16),
                    preferred_element_type=jnp.float32)
        h = jnp.tanh(h + b1)
        return jnp.dot(h.astype(bf16), w2.astype(bf16),
                       preferred_element_type=jnp.float32) + b2

    # Small batch: single grid step, no padding.
    batch = 8
    x = jax.random.normal(k_x, (batch, num_input), jnp.float32)
    out = jax.block_until_ready(module_net_forward(x, w1, b1, w2, b2))
    assert out.shape == (batch, num_output)
    assert jnp.allclose(out, ref_bf16(x), atol=5e-3, rtol=5e-3)
    assert jnp.allclose(out, ref_f32(x), atol=5e-2, rtol=5e-2)

    # Larger, non-tile-aligned batch: 2 grid steps + minimal batch-pad path.
    batch2 = 600
    x2 = jax.random.normal(k_x2, (batch2, num_input), jnp.float32)
    out2 = jax.block_until_ready(module_net_forward(x2, w1, b1, w2, b2))
    assert out2.shape == (batch2, num_output)
    assert jnp.allclose(out2, ref_bf16(x2), atol=5e-3, rtol=5e-3)
    assert jnp.allclose(out2, ref_f32(x2), atol=5e-2, rtol=5e-2)

    print("KERNEL_OK")
</pallas_src>

<mosaic_0001>
module attributes {stable_mosaic.version = 11 : i64} {
  func.func @mlp_kernel(%arg0: i32, %arg1: memref<8x32xf32, #tpu.memory_space<vmem>>, %arg2: memref<32x64xf32, #tpu.memory_space<vmem>>, %arg3: memref<1x64xf32, #tpu.memory_space<vmem>>, %arg4: memref<64x16xf32, #tpu.memory_space<vmem>>, %arg5: memref<1x16xf32, #tpu.memory_space<vmem>>, %arg6: memref<8x16xf32, #tpu.memory_space<vmem>>) attributes {dimension_semantics = [#tpu.dimension_semantics<parallel>], iteration_bounds = array<i64: 1>, scalar_prefetch = 0 : i64, scratch_operands = 0 : i64, tpu.core_type = #tpu.core_type<tc>, window_params = [{transform_indices = @transform_0, window_bounds = array<i64: 8, 32>}, {pipeline_mode = #tpu.pipeline_mode<synchronous>, transform_indices = @transform_1, window_bounds = array<i64: 32, 64>}, {pipeline_mode = #tpu.pipeline_mode<synchronous>, transform_indices = @transform_2, window_bounds = array<i64: 1, 64>}, {pipeline_mode = #tpu.pipeline_mode<synchronous>, transform_indices = @transform_3, window_bounds = array<i64: 64, 16>}, {pipeline_mode = #tpu.pipeline_mode<synchronous>, transform_indices = @transform_4, window_bounds = array<i64: 1, 16>}, {transform_indices = @transform_5, window_bounds = array<i64: 8, 16>}]} {
    %c0 = arith.constant 0 : index
    %c0_0 = arith.constant 0 : index
    %0 = vector.load %arg1[%c0, %c0_0] : memref<8x32xf32, #tpu.memory_space<vmem>>, vector<8x32xf32>
    %1 = arith.truncf %0 : vector<8x32xf32> to vector<8x32xbf16>
    %c0_1 = arith.constant 0 : index
    %c0_2 = arith.constant 0 : index
    %2 = vector.load %arg2[%c0_1, %c0_2] : memref<32x64xf32, #tpu.memory_space<vmem>>, vector<32x64xf32>
    %3 = arith.truncf %2 : vector<32x64xf32> to vector<32x64xbf16>
    %c0_3 = arith.constant 0 : index
    %c0_4 = arith.constant 0 : index
    %4 = vector.load %arg4[%c0_3, %c0_4] : memref<64x16xf32, #tpu.memory_space<vmem>>, vector<64x16xf32>
    %5 = arith.truncf %4 : vector<64x16xf32> to vector<64x16xbf16>
    %cst = arith.constant dense<0.000000e+00> : vector<8x64xf32>
    %6 = tpu.matmul %1, %3, %cst {dimension_numbers = #tpu.dot_dimension_numbers<[1], [0], [0], [1], [0, 0, 1, 1], [], []>} : vector<8x32xbf16>, vector<32x64xbf16>, vector<8x64xf32> -> vector<8x64xf32>
    %c0_5 = arith.constant 0 : index
    %c0_6 = arith.constant 0 : index
    %7 = vector.load %arg3[%c0_5, %c0_6] : memref<1x64xf32, #tpu.memory_space<vmem>>, vector<1x64xf32>
    %8 = vector.broadcast %7 : vector<1x64xf32> to vector<8x64xf32>
    %9 = arith.addf %6, %8 : vector<8x64xf32>
    %10 = math.tanh %9 : vector<8x64xf32>
    %11 = arith.truncf %10 : vector<8x64xf32> to vector<8x64xbf16>
    %cst_7 = arith.constant dense<0.000000e+00> : vector<8x16xf32>
    %12 = tpu.matmul %11, %5, %cst_7 {dimension_numbers = #tpu.dot_dimension_numbers<[1], [0], [0], [1], [0, 0, 1, 1], [], []>} : vector<8x64xbf16>, vector<64x16xbf16>, vector<8x16xf32> -> vector<8x16xf32>
    %c0_8 = arith.constant 0 : index
    %c0_9 = arith.constant 0 : index
    %13 = vector.load %arg5[%c0_8, %c0_9] : memref<1x16xf32, #tpu.memory_space<vmem>>, vector<1x16xf32>
    %14 = vector.broadcast %13 : vector<1x16xf32> to vector<8x16xf32>
    %15 = arith.addf %12, %14 : vector<8x16xf32>
    %c0_10 = arith.constant 0 : index
    %c0_11 = arith.constant 0 : index
    %16 = vector.load %arg6[%c0_10, %c0_11] : memref<8x16xf32, #tpu.memory_space<vmem>>, vector<8x16xf32>
    tpu.vector_store %arg6[%c0_10, %c0_11], %15 {strides = array<i32>} : memref<8x16xf32, #tpu.memory_space<vmem>>, vector<8x16xf32>,
    return
  }
  func.func @transform_0(%arg0: i32) -> (i32, i32) {
    %c0_i32 = arith.constant 0 : i32
    %c0_i32_0 = arith.constant 0 : i32
    return %arg0, %c0_i32 : i32, i32
  }
  func.func @transform_1(%arg0: i32) -> (i32, i32) {
    %c0_i32 = arith.constant 0 : i32
    %c0_i32_0 = arith.constant 0 : i32
    %c0_i32_1 = arith.constant 0 : i32
    return %c0_i32, %c0_i32_0 : i32, i32
  }
  func.func @transform_2(%arg0: i32) -> (i32, i32) {
    %c0_i32 = arith.constant 0 : i32
    %c0_i32_0 = arith.constant 0 : i32
    %c0_i32_1 = arith.constant 0 : i32
    return %c0_i32, %c0_i32_0 : i32, i32
  }
  func.func @transform_3(%arg0: i32) -> (i32, i32) {
    %c0_i32 = arith.constant 0 : i32
    %c0_i32_0 = arith.constant 0 : i32
    %c0_i32_1 = arith.constant 0 : i32
    return %c0_i32, %c0_i32_0 : i32, i32
  }
  func.func @transform_4(%arg0: i32) -> (i32, i32) {
    %c0_i32 = arith.constant 0 : i32
    %c0_i32_0 = arith.constant 0 : i32
    %c0_i32_1 = arith.constant 0 : i32
    return %c0_i32, %c0_i32_0 : i32, i32
  }
  func.func @transform_5(%arg0: i32) -> (i32, i32) {
    %c0_i32 = arith.constant 0 : i32
    %c0_i32_0 = arith.constant 0 : i32
    return %arg0, %c0_i32 : i32, i32
  }
}

</mosaic_0001>

<llo_original>
// kernel: tpu_custom_call.1
$region0: #{tpu_custom_call.1}
  #allocation0 [shape = 'u32[]', space=smem, size = 0x4, offset = 0x4, fixed_abs, tag = 'smem constant byte address 0x4 - core index']
  #allocation1 [shape = 'u32[144,128]{1,0:T(1,128)}', space=vmem, size = 0x12000, scoped, tag = 'internal scratch']
  %s0 = inlined_call_operand.vmem [shape: f32[8,32], index: 0, kind: input, shape index: {}]
  %s1 = inlined_call_operand.vmem [shape: f32[32,64], index: 1, kind: input, shape index: {}]
  %s2 = inlined_call_operand.vmem [shape: f32[1,64], index: 2, kind: input, shape index: {}]
  %s3 = inlined_call_operand.vmem [shape: f32[64,16], index: 3, kind: input, shape index: {}]
  %s4 = inlined_call_operand.vmem [shape: f32[1,16], index: 4, kind: input, shape index: {}]
  %s5 = inlined_call_operand.hbm [shape: f32[8,16], index: 5, kind: output, shape index: {}]
  %s6 = sld [smem:[#allocation0]]
  $region30: #{tpu_custom_call.1} parent=0
    _
  %s8 = ssub.s32 1, %s6
  %s9 = scalar_select 0, %s8, %s6
  $region1: #{tpu_custom_call.1} parent=0
    #allocation2 [shape = 'u8[4096]{0}', space=vmem, size = 0x1000, scoped, tag = 'output window, operand 0, single buffered']
    #allocation3 [shape = 's32[1]{0}', space=sflag, size = 0x4, scoped, tag = 'scoped memory for tpu_custom_call.1']
    %10 = vsyncpa [#allocation3], 0
    // Predicated region
    $region2: #{tpu_custom_call.1} parent=1 // pred_check
      _
    $region3: #{tpu_custom_call.1} parent=1 // pred_check_branch
      %12 = sbr.rel (0) target = $region5
    $region4: #{tpu_custom_call.1} parent=1 // pred_region
      _
    $region5: #{tpu_custom_call.1} parent=1 // pred_fallthru
      _
    // Predicated region
    $region6: #{tpu_custom_call.1} parent=1 // pred_check
      _
    $region7: #{tpu_custom_call.1} parent=1 // pred_check_branch
      %14 = sbr.rel (0) target = $region9
    $region8: #{tpu_custom_call.1} parent=1 // pred_region
      _
    $region9: #{tpu_custom_call.1} parent=1 // pred_fallthru
      _
    // Predicated region
    $region10: #{tpu_custom_call.1} parent=1 // pred_check
      _
    $region11: #{tpu_custom_call.1} parent=1 // pred_check_branch
      %16 = sbr.rel (0) target = $region13
    $region12: #{tpu_custom_call.1} parent=1 // pred_region
      _
    $region13: #{tpu_custom_call.1} parent=1 // pred_fallthru
      _
    // Predicated region
    $region14: #{tpu_custom_call.1} parent=1 // pred_check
      _
    $region15: #{tpu_custom_call.1} parent=1 // pred_check_branch
      %18 = sbr.rel (0) target = $region17
    $region16: #{tpu_custom_call.1} parent=1 // pred_region
      _
    $region17: #{tpu_custom_call.1} parent=1 // pred_fallthru
      _
    // Predicated region
    $region18: #{tpu_custom_call.1} parent=1 // pred_check
      _
    $region19: #{tpu_custom_call.1} parent=1 // pred_check_branch
      %20 = sbr.rel (0) target = $region21
    $region20: #{tpu_custom_call.1} parent=1 // pred_region
      _
    $region21: #{tpu_custom_call.1} parent=1 // pred_fallthru
      _
    %v22 = vld [vmem:[%s0] sm:$0xff]
    %v23 = vpack.c.bf16 %v22, %v22
    %v24 = vld [vmem:[%s1] sm:$0xff]
    %v25 = vld [vmem:[%s1 + $0x8] sm:$0xff]
    %v26 = vld [vmem:[%s1 + $0x10] sm:$0xff]
    %v27 = vld [vmem:[%s1 + $0x18] sm:$0xff]
    %v28 = vpack.c.bf16 %v25, %v24
    %v29 = vpack.c.bf16 %v27, %v26
    %v30 = vld [vmem:[%s3] sm:$0xff]
    %v31 = vld [vmem:[%s3 + $0x8] sm:$0xff]
    %v32 = vld [vmem:[%s3 + $0x10] sm:$0xff]
    %v33 = vld [vmem:[%s3 + $0x18] sm:$0xff]
    %v34 = vld [vmem:[%s3 + $0x20] sm:$0xff]
    %v35 = vld [vmem:[%s3 + $0x28] sm:$0xff]
    %v36 = vld [vmem:[%s3 + $0x30] sm:$0xff]
    %v37 = vld [vmem:[%s3 + $0x38] sm:$0xff]
    %v38 = vpack.c.bf16 %v31, %v30
    %v39 = vpack.c.bf16 %v33, %v32
    %v40 = vpack.c.bf16 %v35, %v34
    %v41 = vpack.c.bf16 %v37, %v36
    %v42 = vld [vmem:[%s2] sm:$0x1]
    %v44 = vlaneseq
    %v45 = vshrl.u32 %v44, 7
    %v46 = vsub.s32 0, %v45
    %v47 = vrot.slane %v42, %v46
    %vm49 = vcmask 261120
    %v51 = vsel %vm49, %v23, 0
    %53 = vmatprep.subr.bf16.mxu0 0
    %54 = vmatpush1.bf16.msra.mxu0 %v28
    %55 = vmatprep.subr.bf16.mxu0 0
    %56 = vmatpush1.bf16.msra.mxu0 %v29
    %57 = vmatprep.subr.bf16.mxu0 0
    %58 = vmatpush1.bf16.msra.mxu0 0
    %59 = vmatprep.subr.bf16.mxu0 0
    %60 = vmatpush1.bf16.msra.mxu0 0
    %61 = vmatprep.subr.bf16.mxu0 0
    %62 = vmatpush1.bf16.msra.mxu0 0
    %63 = vmatprep.subr.bf16.mxu0 0
    %64 = vmatpush1.bf16.msra.mxu0 0
    %65 = vmatprep.subr.bf16.mxu0 0
    %66 = vmatpush1.bf16.msra.mxu0 0
    %67 = vmatprep.subr.bf16.mxu0 0
    %68 = vmatpush1.bf16.msra.mxu0 0
    %69 = vmatprep.subr.bf16.mxu0 0
    %70 = vmatpush1.bf16.msra.mxu0 0
    %71 = vmatprep.subr.bf16.mxu0 0
    %72 = vmatpush1.bf16.msra.mxu0 0
    %73 = vmatprep.subr.bf16.mxu0 0
    %74 = vmatpush1.bf16.msra.mxu0 0
    %75 = vmatprep.subr.bf16.mxu0 0
    %76 = vmatpush1.bf16.msra.mxu0 0
    %77 = vmatprep.subr.bf16.mxu0 0
    %78 = vmatpush1.bf16.msra.mxu0 0
    %79 = vmatprep.subr.bf16.mxu0 0
    %80 = vmatpush1.bf16.msra.mxu0 0
    %81 = vmatprep.subr.bf16.mxu0 0
    %82 = vmatpush1.bf16.msra.mxu0 0
    %83 = vmatprep.subr.bf16.mxu0 0
    %84 = vmatpush1.bf16.msra.mxu0 0
    %85 = vmatprep.mubr.bf16.mxu0 0
    %86 = vmatmul.mubr.bf16.gmra.mrb[0].mxu0 %v51
    %v87 = vpop.f32.mrb[0].mxu0
    %v88 = vadd.f32 %v47, %v87
    %v89 = vpop.f32.mrb[0].mxu0
    %v90 = vpop.f32.mrb[0].mxu0
    %v91 = vpop.f32.mrb[0].mxu0
    %92 = vdwg.mxu0
    %v93 = vtanh.pop %v88
    %v94 = vpack.c.bf16 %v93, %v93
    %v95 = vld [vmem:[%s4] sm:$0x1]
    %v97 = vlaneseq
    %v98 = vshrl.u32 %v97, 7
    %v99 = vsub.s32 0, %v98
    %v100 = vrot.slane %v95, %v99
    %vm102 = vcmask 523264
    %v104 = vsel %vm102, %v94, 0
    %106 = vmatprep.subr.bf16.mxu0 0
    %107 = vmatpush1.bf16.msra.mxu0 %v38
    %108 = vmatprep.subr.bf16.mxu0 0
    %109 = vmatpush1.bf16.msra.mxu0 %v39
    %110 = vmatprep.subr.bf16.mxu0 0
    %111 = vmatpush1.bf16.msra.mxu0 %v40
    %112 = vmatprep.subr.bf16.mxu0 0
    %113 = vmatpush1.bf16.msra.mxu0 %v41
    %114 = vmatprep.subr.bf16.mxu0 0
    %115 = vmatpush1.bf16.msra.mxu0 0
    %116 = vmatprep.subr.bf16.mxu0 0
    %117 = vmatpush1.bf16.msra.mxu0 0
    %118 = vmatprep.subr.bf16.mxu0 0
    %119 = vmatpush1.bf16.msra.mxu0 0
    %120 = vmatprep.subr.bf16.mxu0 0
    %121 = vmatpush1.bf16.msra.mxu0 0
    %122 = vmatprep.subr.bf16.mxu0 0
    %123 = vmatpush1.bf16.msra.mxu0 0
    %124 = vmatprep.subr.bf16.mxu0 0
    %125 = vmatpush1.bf16.msra.mxu0 0
    %126 = vmatprep.subr.bf16.mxu0 0
    %127 = vmatpush1.bf16.msra.mxu0 0
    %128 = vmatprep.subr.bf16.mxu0 0
    %129 = vmatpush1.bf16.msra.mxu0 0
    %130 = vmatprep.subr.bf16.mxu0 0
    %131 = vmatpush1.bf16.msra.mxu0 0
    %132 = vmatprep.subr.bf16.mxu0 0
    %133 = vmatpush1.bf16.msra.mxu0 0
    %134 = vmatprep.subr.bf16.mxu0 0
    %135 = vmatpush1.bf16.msra.mxu0 0
    %136 = vmatprep.subr.bf16.mxu0 0
    %137 = vmatpush1.bf16.msra.mxu0 0
    %138 = vmatprep.mubr.bf16.mxu0 0
    %139 = vmatmul.mubr.bf16.gmra.mrb[0].mxu0 %v104
    %v140 = vpop.f32.mrb[0].mxu0
    %v141 = vadd.f32 %v100, %v140
    %v142 = vpop.f32.mrb[0].mxu0
    %v143 = vpop.f32.mrb[0].mxu0
    %v144 = vpop.f32.mrb[0].mxu0
    %145 = vdwg.mxu0
    %vm146 = vcmask 130048
    %147 = vst.msk [vmem:[#allocation2] sm:$0xff] %vm146, %v141
    // Predicated region
    $region22: #{tpu_custom_call.1} parent=1 // pred_check
      _
    $region23: #{tpu_custom_call.1} parent=1 // pred_check_branch
      %149 = sbr.rel (0) target = $region25
    $region24: #{tpu_custom_call.1} parent=1 // pred_region
      %s151 = ssub.s32 128, 128
      %152 = vsyncadd [#allocation3], %s151
      %s154 = sshll.u32 [#allocation2], 4
      %s155 = int_to_ptr.vmem [resolvable:$true] %s154
      %157 = dma.vmem_to_hbm [thread:$0]  %s155, 128, %s5, [#allocation3]
    $region25: #{tpu_custom_call.1} parent=1 // pred_fallthru
      _
    // Predicated region
    $region26: #{tpu_custom_call.1} parent=1 // pred_check
      _
    $region27: #{tpu_custom_call.1} parent=1 // pred_check_branch
      %159 = sbr.rel (0) target = $region29
    $region28: #{tpu_custom_call.1} parent=1 // pred_region
      %160 = dma.done [#allocation3], 128
    $region29: #{tpu_custom_call.1} parent=1 // pred_fallthru
      _
    %161 = vsyncpa [#allocation3], 1

</llo_original>
